<compile_context>
chip_gen: v6e
topology: v6e:2x2x1
jax: 0.10.0
libtpu: 0.0.40
codegen_flags: <defaults>
</compile_context>

<pallas_src>
import functools

import jax
import jax.numpy as jnp
from jax.experimental import pallas as pl
from jax.experimental.pallas import tpu as pltpu

LANE = 128
SUBLANE = 8


def _round_up(x, m):
    return (x + m - 1) // m * m


def _cnn_kernel(emb_ref, w1_ref, b1_ref, w2_ref, b2_ref, out_ref, *, valid_s):
    # emb_ref : (TB, Sp, E)   bf16 embeddings (no channel padding)
    # w1_ref  : (3*E, Hp)     bf16 conv1 weights, tap-major rows [w(s-1); w(s); w(s+1)]
    # b1_ref  : (1, Hp)       f32
    # w2_ref  : (3, Hp, Hp)   bf16 conv2 tap matrices
    # b2_ref  : (1, Hp)       f32
    # out_ref : (TB, Hp)      f32 per-sequence max-pooled features
    TB, Sp, E = emb_ref.shape
    Hp = out_ref.shape[1]
    R = TB * Sp  # rows of the flattened (batch*seq, channel) operands

    # Sequence position of every flattened row.  Sp is a multiple of 8, so the
    # (TB, Sp, C) <-> (R, C) reshapes below are pure relabelings.
    seq_pos = jax.lax.broadcasted_iota(jnp.int32, (R, 1), 0) % Sp
    at_first = seq_pos == 0        # rows whose "previous" tap is the conv zero-pad
    at_last = seq_pos == Sp - 1    # rows whose "next" tap is the conv zero-pad

    def shift_rows(t, shift, wrap_mask):
        # result[r] = t[(r - shift) % R], with wrapped rows zeroed -> exactly the
        # +/-1 sequence shift of a k=3 / pad=1 conv (cross-batch leakage lands
        # only on the masked boundary rows).  The rotation runs in the XLU slot;
        # done in f32 (32-bit sublane rotate), cast to bf16 for the MXU.
        rolled = pltpu.roll(t.astype(jnp.float32), shift=shift, axis=0)
        return jnp.where(wrap_mask, 0.0, rolled).astype(jnp.bfloat16)

    x = emb_ref[...].reshape(R, E)                                   # bf16
    if valid_s < Sp:  # zero padded sequence rows so the conv halo stays correct
        x = jnp.where(seq_pos < valid_s, x, jnp.zeros_like(x))

    # ---- conv1 (k=3, pad=1): im2col -> ONE matmul with K = 3*E ----
    cols = jnp.concatenate(
        [shift_rows(x, 1, at_first), x, shift_rows(x, R - 1, at_last)], axis=-1)
    a1 = jnp.dot(cols, w1_ref[...], preferred_element_type=jnp.float32)  # (R, Hp)
    h1 = jnp.maximum(a1 + b1_ref[...], 0.0)
    if valid_s < Sp:
        h1 = jnp.where(seq_pos < valid_s, h1, 0.0)

    # ---- conv2 (k=3, pad=1): three accumulating matmuls, K = Hp each ----
    # (never builds the (R, 3*Hp) operand; padded h1 columns are exactly 0 and
    #  the corresponding padded w2 rows are 0, so padding never leaks.)
    a2 = jnp.dot(h1.astype(jnp.bfloat16), w2_ref[1],
                 preferred_element_type=jnp.float32)
    a2 = a2 + jnp.dot(shift_rows(h1, 1, at_first), w2_ref[0],
                      preferred_element_type=jnp.float32)
    a2 = a2 + jnp.dot(shift_rows(h1, R - 1, at_last), w2_ref[2],
                      preferred_element_type=jnp.float32)
    h2 = jnp.maximum(a2 + b2_ref[...], 0.0)                              # (R, Hp)

    # ---- max over sequence positions -> lane-dense (TB, Hp) output slab ----
    # ReLU output is >= 0, so masking padded rows to 0 leaves the max unchanged.
    if valid_s < Sp:
        h2 = jnp.where(seq_pos < valid_s, h2, 0.0)
    out_ref[...] = jnp.max(h2.reshape(TB, Sp, Hp), axis=1)


def cnn_forward(x_ids, lengths, emb_table, w1, b1, w2, b2, *, batch_tile=None):
    """x_ids: (B, S) int32 token ids; `lengths` unused (the PyTorch forward never masks)."""
    del lengths  # matches the reference forward
    B, S = x_ids.shape
    _, E = emb_table.shape
    H = w1.shape[2]

    Sp = _round_up(S, SUBLANE)   # aligned sublane extent -> free in-kernel reshapes
    Hp = _round_up(H, LANE)      # lane-dense matmul N / unmasked output stores

    # Per-step matmul M = tb*Sp; target ~512 rows: amortizes the ~0.35us grid-step
    # overhead and keeps the per-step working set comfortably inside v7x's 64 MiB
    # VMEM (and v5e's 16 MiB default scoped VMEM).
    if batch_tile is None:
        batch_tile = max(1, 512 // Sp)
    if B <= batch_tile:
        tb, Bp = B, B                      # one step covers the whole batch
    else:
        tb = _round_up(min(batch_tile, B), SUBLANE)
        Bp = _round_up(B, tb)
    # NOTE: on v7x a 1-step grid uses only one TensorCore; the output BlockSpec's
    # 8-row alignment means we only split the batch when B > batch_tile.

    # Glue: pad the *ids* (cheap) and gather straight from a bf16 table -> a single
    # minimal-size (Bp, Sp, E) bf16 activation in HBM.  (In a real deployment the
    # bf16 table cast is hoisted and done once.)
    ids = jnp.pad(x_ids, ((0, Bp - B), (0, Sp - S)))
    embed = jnp.take(emb_table.astype(jnp.bfloat16), ids, axis=0)    # (Bp, Sp, E)

    # Weights: conv1 taps fused into one (3E, Hp) matrix (tap-major rows matching
    # the [prev, cur, next] im2col concat); conv2 kept as three (Hp, Hp) tap
    # matrices for the roll-accumulate form.  Output-channel padding is zeros, so
    # padded columns stay exactly 0 through ReLU and are sliced off at the end.
    w1m = jnp.pad(w1, ((0, 0), (0, 0), (0, Hp - H))).astype(jnp.bfloat16)
    w1m = w1m.reshape(3 * E, Hp)
    w2m = jnp.pad(w2, ((0, 0), (0, Hp - H), (0, Hp - H))).astype(jnp.bfloat16)
    b1p = jnp.pad(b1, (0, Hp - H)).astype(jnp.float32).reshape(1, Hp)
    b2p = jnp.pad(b2, (0, Hp - H)).astype(jnp.float32).reshape(1, Hp)

    out = pl.pallas_call(
        functools.partial(_cnn_kernel, valid_s=S),
        out_shape=jax.ShapeDtypeStruct((Bp, Hp), jnp.float32),
        grid=(Bp // tb,),
        in_specs=[
            pl.BlockSpec((tb, Sp, E), lambda i: (i, 0, 0)),
            # Weight/bias index maps are constant (resident across all steps).
            pl.BlockSpec((3 * E, Hp), lambda i: (0, 0)),
            pl.BlockSpec((1, Hp), lambda i: (0, 0)),
            pl.BlockSpec((3, Hp, Hp), lambda i: (0, 0, 0)),
            pl.BlockSpec((1, Hp), lambda i: (0, 0)),
        ],
        out_specs=pl.BlockSpec((tb, Hp), lambda i: (i, 0)),
        compiler_params=pltpu.CompilerParams(
            dimension_semantics=("parallel",)),
    )(embed, w1m, b1p, w2m, b2p)
    return out[:B, :H]  # strip batch/channel padding -> (B, H)


def _reference(x_ids, emb_table, w1, b1, w2, b2):
    """Pure-JAX f32 reference mirroring the PyTorch forward."""
    embed = jnp.take(emb_table, x_ids, axis=0)            # (B, S, E)
    xp = jnp.pad(embed, ((0, 0), (1, 1), (0, 0)))
    S = x_ids.shape[1]
    h1 = sum(jnp.einsum('bse,eh->bsh', xp[:, k:k + S, :], w1[k])
             for k in range(3)) + b1
    h1 = jnp.maximum(h1, 0.0)
    hp = jnp.pad(h1, ((0, 0), (1, 1), (0, 0)))
    h2 = sum(jnp.einsum('bsh,hk->bsk', hp[:, k:k + S, :], w2[k])
             for k in range(3)) + b2
    h2 = jnp.maximum(h2, 0.0)
    return jnp.max(h2, axis=1)


if __name__ == "__main__":
    # Small, forward-consistent shapes.
    batch, seq_len = 2, 8
    emb_size, hidden_size, vocab_size = 16, 32, 50

    key = jax.random.PRNGKey(0)
    k_emb, k_w1, k_b1, k_w2, k_b2, k_x = jax.random.split(key, 6)

    # Deterministic "pretrained" embedding table + conv parameters.
    emb_table = jax.random.normal(k_emb, (vocab_size, emb_size), jnp.float32) * 0.1
    # Conv1d weights in PyTorch are (out, in, k); stored tap-major (k, in, out) here.
    w1 = jax.random.normal(k_w1, (3, emb_size, hidden_size), jnp.float32) * 0.1
    b1 = jax.random.normal(k_b1, (hidden_size,), jnp.float32) * 0.1
    w2 = jax.random.normal(k_w2, (3, hidden_size, hidden_size), jnp.float32) * 0.1
    b2 = jax.random.normal(k_b2, (hidden_size,), jnp.float32) * 0.1

    x_ids = jax.random.randint(k_x, (batch, seq_len), 0, vocab_size, jnp.int32)
    lengths = jnp.full((batch,), seq_len, jnp.int32)  # unused, matches signature

    out = cnn_forward(x_ids, lengths, emb_table, w1, b1, w2, b2)
    out = jax.block_until_ready(out)

    ref = _reference(x_ids, emb_table, w1, b1, w2, b2)
    assert out.shape == (batch, hidden_size)
    # bf16 MXU inputs (f32 accumulation) -> loosened tolerance vs f32 reference.
    assert jnp.allclose(out, ref, atol=2e-2, rtol=2e-2), "mismatch vs reference"

    print("KERNEL_OK")
</pallas_src>

<mosaic_0001>
module attributes {stable_mosaic.version = 11 : i64} {
  func.func @_cnn_kernel(%arg0: i32, %arg1: memref<2x8x16xbf16, #tpu.memory_space<vmem>>, %arg2: memref<48x128xbf16, #tpu.memory_space<vmem>>, %arg3: memref<1x128xf32, #tpu.memory_space<vmem>>, %arg4: memref<3x128x128xbf16, #tpu.memory_space<vmem>>, %arg5: memref<1x128xf32, #tpu.memory_space<vmem>>, %arg6: memref<2x128xf32, #tpu.memory_space<vmem>>) attributes {dimension_semantics = [#tpu.dimension_semantics<parallel>], iteration_bounds = array<i64: 1>, scalar_prefetch = 0 : i64, scratch_operands = 0 : i64, tpu.core_type = #tpu.core_type<tc>, window_params = [{transform_indices = @transform_0, window_bounds = array<i64: 2, 8, 16>}, {pipeline_mode = #tpu.pipeline_mode<synchronous>, transform_indices = @transform_1, window_bounds = array<i64: 48, 128>}, {pipeline_mode = #tpu.pipeline_mode<synchronous>, transform_indices = @transform_2, window_bounds = array<i64: 1, 128>}, {pipeline_mode = #tpu.pipeline_mode<synchronous>, transform_indices = @transform_3, window_bounds = array<i64: 3, 128, 128>}, {pipeline_mode = #tpu.pipeline_mode<synchronous>, transform_indices = @transform_4, window_bounds = array<i64: 1, 128>}, {transform_indices = @transform_5, window_bounds = array<i64: 2, 128>}]} {
    %0 = tpu.iota {dimensions = array<i32: 0>} : vector<16x1xi32>
    %c8_i32 = arith.constant 8 : i32
    %c0_i32 = arith.constant 0 : i32
    %1 = arith.cmpi eq, %c8_i32, %c0_i32 : i32
    %c1_i32 = arith.constant 1 : i32
    %2 = arith.select %1, %c1_i32, %c8_i32 : i32
    %3 = vector.broadcast %2 : i32 to vector<16x1xi32>
    %4 = arith.remsi %0, %3 : vector<16x1xi32>
    %c0_i32_0 = arith.constant 0 : i32
    %5 = vector.broadcast %c0_i32_0 : i32 to vector<16x1xi32>
    %6 = arith.cmpi ne, %4, %5 : vector<16x1xi32>
    %c0_i32_1 = arith.constant 0 : i32
    %7 = vector.broadcast %c0_i32_1 : i32 to vector<16x1xi32>
    %8 = arith.cmpi slt, %4, %7 : vector<16x1xi32>
    %c0_i32_2 = arith.constant 0 : i32
    %9 = arith.cmpi slt, %2, %c0_i32_2 : i32
    %10 = vector.broadcast %9 : i1 to vector<16x1xi1>
    %11 = vector.broadcast %10 : vector<16x1xi1> to vector<16x1xi1>
    %12 = arith.xori %8, %11 : vector<16x1xi1>
    %13 = arith.andi %12, %6 : vector<16x1xi1>
    %14 = vector.broadcast %2 : i32 to vector<16x1xi32>
    %15 = arith.addi %4, %14 : vector<16x1xi32>
    %16 = arith.select %13, %15, %4 : vector<16x1xi1>, vector<16x1xi32>
    %c0_i32_3 = arith.constant 0 : i32
    %17 = vector.broadcast %c0_i32_3 : i32 to vector<16x1xi32>
    %18 = arith.cmpi eq, %16, %17 : vector<16x1xi32>
    %c7_i32 = arith.constant 7 : i32
    %19 = vector.broadcast %c7_i32 : i32 to vector<16x1xi32>
    %20 = arith.cmpi eq, %16, %19 : vector<16x1xi32>
    %c0 = arith.constant 0 : index
    %c0_4 = arith.constant 0 : index
    %c0_5 = arith.constant 0 : index
    %21 = vector.load %arg1[%c0, %c0_4, %c0_5] : memref<2x8x16xbf16, #tpu.memory_space<vmem>>, vector<2x8x16xbf16>
    %22 = vector.shape_cast %21 : vector<2x8x16xbf16> to vector<16x16xbf16>
    %23 = arith.extf %22 : vector<16x16xbf16> to vector<16x16xf32>
    %c1_i32_6 = arith.constant 1 : i32
    %24 = tpu.dynamic_rotate %23 by %c1_i32_6 dim 0 : vector<16x16xf32>, i32 -> vector<16x16xf32>
    %cst = arith.constant 0.000000e+00 : f32
    %25 = vector.shape_cast %18 : vector<16x1xi1> to vector<16x1xi1>
    %26 = vector.broadcast %25 : vector<16x1xi1> to vector<16x16xi1>
    %27 = vector.broadcast %cst : f32 to vector<16x16xf32>
    %28 = arith.select %26, %27, %24 : vector<16x16xi1>, vector<16x16xf32>
    %29 = arith.truncf %28 : vector<16x16xf32> to vector<16x16xbf16>
    %30 = arith.extf %22 : vector<16x16xbf16> to vector<16x16xf32>
    %c15_i32 = arith.constant 15 : i32
    %31 = tpu.dynamic_rotate %30 by %c15_i32 dim 0 : vector<16x16xf32>, i32 -> vector<16x16xf32>
    %cst_7 = arith.constant 0.000000e+00 : f32
    %32 = vector.shape_cast %20 : vector<16x1xi1> to vector<16x1xi1>
    %33 = vector.broadcast %32 : vector<16x1xi1> to vector<16x16xi1>
    %34 = vector.broadcast %cst_7 : f32 to vector<16x16xf32>
    %35 = arith.select %33, %34, %31 : vector<16x16xi1>, vector<16x16xf32>
    %36 = arith.truncf %35 : vector<16x16xf32> to vector<16x16xbf16>
    %37 = tpu.concatenate %29, %22, %36 in 1 : vector<16x16xbf16>, vector<16x16xbf16>, vector<16x16xbf16> -> vector<16x48xbf16>
    %c0_8 = arith.constant 0 : index
    %c0_9 = arith.constant 0 : index
    %38 = vector.load %arg2[%c0_8, %c0_9] : memref<48x128xbf16, #tpu.memory_space<vmem>>, vector<48x128xbf16>
    %cst_10 = arith.constant dense<0.000000e+00> : vector<16x128xf32>
    %39 = tpu.matmul %37, %38, %cst_10 {dimension_numbers = #tpu.dot_dimension_numbers<[1], [0], [0], [1], [0, 0, 1, 1], [], []>} : vector<16x48xbf16>, vector<48x128xbf16>, vector<16x128xf32> -> vector<16x128xf32>
    %c0_11 = arith.constant 0 : index
    %c0_12 = arith.constant 0 : index
    %40 = vector.load %arg3[%c0_11, %c0_12] : memref<1x128xf32, #tpu.memory_space<vmem>>, vector<1x128xf32>
    %41 = vector.broadcast %40 : vector<1x128xf32> to vector<16x128xf32>
    %42 = arith.addf %39, %41 : vector<16x128xf32>
    %cst_13 = arith.constant 0.000000e+00 : f32
    %43 = vector.broadcast %cst_13 : f32 to vector<16x128xf32>
    %44 = arith.maximumf %42, %43 : vector<16x128xf32>
    %45 = arith.truncf %44 : vector<16x128xf32> to vector<16x128xbf16>
    %c1 = arith.constant 1 : index
    %c0_14 = arith.constant 0 : index
    %c0_15 = arith.constant 0 : index
    %46 = vector.load %arg4[%c1, %c0_14, %c0_15] : memref<3x128x128xbf16, #tpu.memory_space<vmem>>, vector<1x128x128xbf16>
    %47 = vector.shape_cast %46 : vector<1x128x128xbf16> to vector<128x128xbf16>
    %cst_16 = arith.constant dense<0.000000e+00> : vector<16x128xf32>
    %48 = tpu.matmul %45, %47, %cst_16 {dimension_numbers = #tpu.dot_dimension_numbers<[1], [0], [0], [1], [0, 0, 1, 1], [], []>} : vector<16x128xbf16>, vector<128x128xbf16>, vector<16x128xf32> -> vector<16x128xf32>
    %c1_i32_17 = arith.constant 1 : i32
    %49 = tpu.dynamic_rotate %44 by %c1_i32_17 dim 0 : vector<16x128xf32>, i32 -> vector<16x128xf32>
    %cst_18 = arith.constant 0.000000e+00 : f32
    %50 = vector.shape_cast %18 : vector<16x1xi1> to vector<16x1xi1>
    %51 = vector.broadcast %50 : vector<16x1xi1> to vector<16x128xi1>
    %52 = vector.broadcast %cst_18 : f32 to vector<16x128xf32>
    %53 = arith.select %51, %52, %49 : vector<16x128xi1>, vector<16x128xf32>
    %54 = arith.truncf %53 : vector<16x128xf32> to vector<16x128xbf16>
    %c0_19 = arith.constant 0 : index
    %c0_20 = arith.constant 0 : index
    %c0_21 = arith.constant 0 : index
    %55 = vector.load %arg4[%c0_19, %c0_20, %c0_21] : memref<3x128x128xbf16, #tpu.memory_space<vmem>>, vector<1x128x128xbf16>
    %56 = vector.shape_cast %55 : vector<1x128x128xbf16> to vector<128x128xbf16>
    %cst_22 = arith.constant dense<0.000000e+00> : vector<16x128xf32>
    %57 = tpu.matmul %54, %56, %cst_22 {dimension_numbers = #tpu.dot_dimension_numbers<[1], [0], [0], [1], [0, 0, 1, 1], [], []>} : vector<16x128xbf16>, vector<128x128xbf16>, vector<16x128xf32> -> vector<16x128xf32>
    %58 = arith.addf %48, %57 : vector<16x128xf32>
    %c15_i32_23 = arith.constant 15 : i32
    %59 = tpu.dynamic_rotate %44 by %c15_i32_23 dim 0 : vector<16x128xf32>, i32 -> vector<16x128xf32>
    %cst_24 = arith.constant 0.000000e+00 : f32
    %60 = vector.shape_cast %20 : vector<16x1xi1> to vector<16x1xi1>
    %61 = vector.broadcast %60 : vector<16x1xi1> to vector<16x128xi1>
    %62 = vector.broadcast %cst_24 : f32 to vector<16x128xf32>
    %63 = arith.select %61, %62, %59 : vector<16x128xi1>, vector<16x128xf32>
    %64 = arith.truncf %63 : vector<16x128xf32> to vector<16x128xbf16>
    %c2 = arith.constant 2 : index
    %c0_25 = arith.constant 0 : index
    %c0_26 = arith.constant 0 : index
    %65 = vector.load %arg4[%c2, %c0_25, %c0_26] : memref<3x128x128xbf16, #tpu.memory_space<vmem>>, vector<1x128x128xbf16>
    %66 = vector.shape_cast %65 : vector<1x128x128xbf16> to vector<128x128xbf16>
    %cst_27 = arith.constant dense<0.000000e+00> : vector<16x128xf32>
    %67 = tpu.matmul %64, %66, %cst_27 {dimension_numbers = #tpu.dot_dimension_numbers<[1], [0], [0], [1], [0, 0, 1, 1], [], []>} : vector<16x128xbf16>, vector<128x128xbf16>, vector<16x128xf32> -> vector<16x128xf32>
    %68 = arith.addf %58, %67 : vector<16x128xf32>
    %c0_28 = arith.constant 0 : index
    %c0_29 = arith.constant 0 : index
    %69 = vector.load %arg5[%c0_28, %c0_29] : memref<1x128xf32, #tpu.memory_space<vmem>>, vector<1x128xf32>
    %70 = vector.broadcast %69 : vector<1x128xf32> to vector<16x128xf32>
    %71 = arith.addf %68, %70 : vector<16x128xf32>
    %cst_30 = arith.constant 0.000000e+00 : f32
    %72 = vector.broadcast %cst_30 : f32 to vector<16x128xf32>
    %73 = arith.maximumf %71, %72 : vector<16x128xf32>
    %74 = vector.shape_cast %73 : vector<16x128xf32> to vector<2x8x128xf32>
    %cst_31 = arith.constant dense<0xFF800000> : vector<2x128xf32>
    %75 = vector.multi_reduction <maximumf>, %74, %cst_31 [1] : vector<2x8x128xf32> to vector<2x128xf32>
    %c0_32 = arith.constant 0 : index
    %c0_33 = arith.constant 0 : index
    %76 = vector.load %arg6[%c0_32, %c0_33] : memref<2x128xf32, #tpu.memory_space<vmem>>, vector<2x128xf32>
    tpu.vector_store %arg6[%c0_32, %c0_33], %75 {strides = array<i32>} : memref<2x128xf32, #tpu.memory_space<vmem>>, vector<2x128xf32>,
    return
  }
  func.func @transform_0(%arg0: i32) -> (i32, i32, i32) {
    %c0_i32 = arith.constant 0 : i32
    %c0_i32_0 = arith.constant 0 : i32
    %c0_i32_1 = arith.constant 0 : i32
    return %arg0, %c0_i32, %c0_i32_0 : i32, i32, i32
  }
  func.func @transform_1(%arg0: i32) -> (i32, i32) {
    %c0_i32 = arith.constant 0 : i32
    %c0_i32_0 = arith.constant 0 : i32
    %c0_i32_1 = arith.constant 0 : i32
    return %c0_i32, %c0_i32_0 : i32, i32
  }
  func.func @transform_2(%arg0: i32) -> (i32, i32) {
    %c0_i32 = arith.constant 0 : i32
    %c0_i32_0 = arith.constant 0 : i32
    %c0_i32_1 = arith.constant 0 : i32
    return %c0_i32, %c0_i32_0 : i32, i32
  }
  func.func @transform_3(%arg0: i32) -> (i32, i32, i32) {
    %c0_i32 = arith.constant 0 : i32
    %c0_i32_0 = arith.constant 0 : i32
    %c0_i32_1 = arith.constant 0 : i32
    %c0_i32_2 = arith.constant 0 : i32
    return %c0_i32, %c0_i32_0, %c0_i32_1 : i32, i32, i32
  }
  func.func @transform_4(%arg0: i32) -> (i32, i32) {
    %c0_i32 = arith.constant 0 : i32
    %c0_i32_0 = arith.constant 0 : i32
    %c0_i32_1 = arith.constant 0 : i32
    return %c0_i32, %c0_i32_0 : i32, i32
  }
  func.func @transform_5(%arg0: i32) -> (i32, i32) {
    %c0_i32 = arith.constant 0 : i32
    %c0_i32_0 = arith.constant 0 : i32
    return %arg0, %c0_i32 : i32, i32
  }
}

</mosaic_0001>

<llo_original>
// kernel: tpu_custom_call.1
$region0: #{tpu_custom_call.1}
  #allocation0 [shape = 'u32[]', space=smem, size = 0x4, offset = 0x4, fixed_abs, tag = 'smem constant byte address 0x4 - core index']
  #allocation1 [shape = 'u32[144,128]{1,0:T(1,128)}', space=vmem, size = 0x12000, scoped, tag = 'internal scratch']
  %s0 = inlined_call_operand.hbm [shape: bf16[2,8,16], index: 0, kind: input, shape index: {}]
  %s1 = inlined_call_operand.hbm [shape: bf16[48,128], index: 1, kind: input, shape index: {}]
  %s2 = inlined_call_operand.vmem [shape: f32[1,128], index: 2, kind: input, shape index: {}]
  %s3 = inlined_call_operand.hbm [shape: bf16[3,128,128], index: 3, kind: input, shape index: {}]
  %s4 = inlined_call_operand.vmem [shape: f32[1,128], index: 4, kind: input, shape index: {}]
  %s5 = inlined_call_operand.hbm [shape: f32[2,128], index: 5, kind: output, shape index: {}]
  %s6 = sld [smem:[#allocation0]]
  $region42: #{tpu_custom_call.1} parent=0
    _
  %s8 = ssub.s32 1, %s6
  %s9 = scalar_select 0, %s8, %s6
  $region1: #{tpu_custom_call.1} parent=0
    #allocation2 [shape = 'u8[4096]{0}', space=vmem, size = 0x1000, scoped, tag = 'input window, operand 0, single buffered']
    #allocation3 [shape = 's32[1]{0}', space=sflag, size = 0x4, scoped, tag = 'scoped memory for tpu_custom_call.1']
    #allocation4 [shape = 's32[1]{0}', space=sflag, size = 0x4, scoped, tag = 'scoped memory for tpu_custom_call.1']
    #allocation5 [shape = 'u8[12288]{0}', space=vmem, size = 0x3000, scoped, tag = 'input window, operand 1, single buffered']
    #allocation6 [shape = 's32[1]{0}', space=sflag, size = 0x4, scoped, tag = 'scoped memory for tpu_custom_call.1']
    #allocation7 [shape = 'u8[98304]{0}', space=vmem, size = 0x18000, scoped, tag = 'input window, operand 3, single buffered']
    #allocation8 [shape = 'u8[1024]{0}', space=vmem, size = 0x400, scoped, tag = 'output window, operand 0, single buffered']
    %10 = vsyncpa [#allocation3], 0
    %11 = vsyncpa [#allocation6], 0
    %12 = vsyncpa [#allocation4], 0
    // Predicated region
    $region2: #{tpu_custom_call.1} parent=1 // pred_check
      _
    $region3: #{tpu_custom_call.1} parent=1 // pred_check_branch
      %14 = sbr.rel (0) target = $region5
    $region4: #{tpu_custom_call.1} parent=1 // pred_region
      %s16 = ssub.s32 128, 128
      %17 = vsyncadd [#allocation3], %s16
      %s18 = sshll.u32 [#allocation2], 4
      %s19 = int_to_ptr.vmem [resolvable:$true] %s18
      %24 = dma.hbm_to_vmem [thread:$0]  %s0, 128, %s19, [#allocation3], 64, 64, 4
    $region5: #{tpu_custom_call.1} parent=1 // pred_fallthru
      _
    // Predicated region
    $region6: #{tpu_custom_call.1} parent=1 // pred_check
      _
    $region7: #{tpu_custom_call.1} parent=1 // pred_check_branch
      %26 = sbr.rel (0) target = $region9
    $region8: #{tpu_custom_call.1} parent=1 // pred_region
      %s28 = ssub.s32 384, 384
      %29 = vsyncadd [#allocation6], %s28
      %s30 = sshll.u32 [#allocation5], 4
      %s31 = int_to_ptr.vmem [resolvable:$true] %s30
      %36 = dma.hbm_to_vmem [thread:$0]  %s1, 384, %s31, [#allocation6], 64, 64, 4
    $region9: #{tpu_custom_call.1} parent=1 // pred_fallthru
      _
    // Predicated region
    $region10: #{tpu_custom_call.1} parent=1 // pred_check
      _
    $region11: #{tpu_custom_call.1} parent=1 // pred_check_branch
      %38 = sbr.rel (0) target = $region13
    $region12: #{tpu_custom_call.1} parent=1 // pred_region
      _
    $region13: #{tpu_custom_call.1} parent=1 // pred_fallthru
      _
    // Predicated region
    $region14: #{tpu_custom_call.1} parent=1 // pred_check
      _
    $region15: #{tpu_custom_call.1} parent=1 // pred_check_branch
      %40 = sbr.rel (0) target = $region17
    $region16: #{tpu_custom_call.1} parent=1 // pred_region
      %s42 = ssub.s32 3072, 3072
      %43 = vsyncadd [#allocation6], %s42
      %s44 = sshll.u32 [#allocation7], 4
      %s45 = int_to_ptr.vmem [resolvable:$true] %s44
      %50 = dma.hbm_to_vmem [thread:$0]  %s3, 3072, %s45, [#allocation6], 64, 64, 4
    $region17: #{tpu_custom_call.1} parent=1 // pred_fallthru
      _
    // Predicated region
    $region18: #{tpu_custom_call.1} parent=1 // pred_check
      _
    $region19: #{tpu_custom_call.1} parent=1 // pred_check_branch
      %52 = sbr.rel (0) target = $region21
    $region20: #{tpu_custom_call.1} parent=1 // pred_region
      _
    $region21: #{tpu_custom_call.1} parent=1 // pred_fallthru
      _
    // Predicated region
    $region22: #{tpu_custom_call.1} parent=1 // pred_check
      _
    $region23: #{tpu_custom_call.1} parent=1 // pred_check_branch
      %54 = sbr.rel (0) target = $region25
    $region24: #{tpu_custom_call.1} parent=1 // pred_region
      %55 = dma.done [#allocation3], 128
    $region25: #{tpu_custom_call.1} parent=1 // pred_fallthru
      _
    // Predicated region
    $region26: #{tpu_custom_call.1} parent=1 // pred_check
      _
    $region27: #{tpu_custom_call.1} parent=1 // pred_check_branch
      %57 = sbr.rel (0) target = $region29
    $region28: #{tpu_custom_call.1} parent=1 // pred_region
      %58 = dma.done [#allocation6], 384
    $region29: #{tpu_custom_call.1} parent=1 // pred_fallthru
      _
    // Predicated region
    $region30: #{tpu_custom_call.1} parent=1 // pred_check
      _
    $region31: #{tpu_custom_call.1} parent=1 // pred_check_branch
      %60 = sbr.rel (0) target = $region33
    $region32: #{tpu_custom_call.1} parent=1 // pred_region
      %61 = dma.done [#allocation6], 3072
    $region33: #{tpu_custom_call.1} parent=1 // pred_fallthru
      _
    %v63 = vlaneseq
    %v64 = vshrl.u32 %v63, 7
    %v65 = vadd.s32 %v64, 8
    %vm66 = vcmp.lt.s32.totalorder %v64, 0
    %v67 = vsub.s32 0, %v64
    %v68 = vsel %vm66, %v67, %v64
    %v69 = vshrl.u32 %v68, 3
    %v70 = vand.u32 %v68, 7
    %v71 = vsub.s32 0, %v70
    %v72 = vsel %vm66, %v71, %v70
    %vm73 = vcmp.lt.s32.totalorder %v65, 0
    %v74 = vsub.s32 0, %v65
    %v75 = vsel %vm73, %v74, %v65
    %v76 = vshrl.u32 %v75, 3
    %v77 = vand.u32 %v75, 7
    %v78 = vsub.s32 0, %v77
    %v79 = vsel %vm73, %v78, %v77
    %vm80 = vcmp.ne.s32.totalorder %v72, 0
    %vm81 = vcmp.ne.s32.totalorder %v79, 0
    %vm82 = vcmp.lt.s32.totalorder %v72, 0
    %vm83 = vcmp.lt.s32.totalorder %v79, 0
    %vm84 = vmand %vm82, %vm80
    %vm85 = vmand %vm83, %vm81
    %v86 = vadd.s32 %v72, 8
    %v87 = vadd.s32 %v79, 8
    %v88 = vsel %vm84, %v86, %v72
    %v89 = vsel %vm85, %v87, %v79
    %vm90 = vcmp.eq.s32.totalorder %v88, 0
    %vm91 = vcmp.eq.s32.totalorder %v89, 0
    %vm92 = vcmp.eq.s32.totalorder %v88, 7
    %vm93 = vcmp.eq.s32.totalorder %v89, 7
    %v94 = vld [vmem:[#allocation2] sm:$0xf]
    %v95 = vld [vmem:[#allocation2 + $0x4] sm:$0xf]
    %v96 = vunpack.c.l.bf16 %v94
    %v97 = vunpack.c.l.bf16 %v95
    %v98 = vrot.slane %v96, 7
    %v99 = vrot.slane %v97, 7
    %vm100 = vcmp.lt.s32.totalorder %v64, 1
    %v101 = vsel %vm100, %v98, %v99
    %v102 = vsel %vm100, %v99, %v98
    %v103 = vsel %vm90, 1, 0
    %v104 = vsel %vm91, 1, 0
    %vm105 = vcmp.eq.s32.totalorder %v103, 1
    %vm106 = vcmp.eq.s32.totalorder %v104, 1
    %v107 = vsel %vm105, 0.0, %v102
    %v108 = vsel %vm106, 0.0, %v101
    %v109 = vpack.c.bf16 %v108, %v107
    %v110 = vrot.slane %v96, 1
    %v111 = vrot.slane %v97, 1
    %vm112 = vcmp.lt.s32.totalorder %v64, 7
    %v113 = vsel %vm112, %v110, %v111
    %v114 = vsel %vm112, %v111, %v110
    %v115 = vsel %vm92, 1, 0
    %v116 = vsel %vm93, 1, 0
    %vm117 = vcmp.eq.s32.totalorder %v115, 1
    %vm118 = vcmp.eq.s32.totalorder %v116, 1
    %v119 = vsel %vm117, 0.0, %v113
    %v120 = vsel %vm118, 0.0, %v114
    %v121 = vpack.c.bf16 %v120, %v119
    %v124 = vunpack.c.l.b16 %v94
    %v125 = vunpack.c.l.b16 %v95
    %v126 = vpack.c.b16 %v125, %v124
    %127 = vrot.lane.b32.xlu0 %v126, 16
    %v128 = vpop.permute.xlu0 %127
    %130 = vrot.lane.b32.xlu0 %v121, 32
    %v131 = vpop.permute.xlu0 %130
    %vm132 = vcmask 130048
    %v135 = vsel %vm132, %v109, %v128
    %vm136 = vcmask 261120
    %v138 = vsel %vm136, %v135, %v131
    %v139 = vld [vmem:[#allocation5] sm:$0xf]
    %v140 = vld [vmem:[#allocation5 + $0x4] sm:$0xf]
    %v141 = vld [vmem:[#allocation5 + $0x8] sm:$0xf]
    %v142 = vld [vmem:[#allocation5 + $0xc] sm:$0xf]
    %v143 = vld [vmem:[#allocation5 + $0x10] sm:$0xf]
    %v144 = vld [vmem:[#allocation5 + $0x14] sm:$0xf]
    %v145 = vld [vmem:[%s2] sm:$0x1]
    %v147 = vlaneseq
    %v148 = vshrl.u32 %v147, 7
    %v149 = vsub.s32 0, %v148
    %v150 = vrot.slane %v145, %v149
    %v158 = vunpack.c.l.b16 %v139
    %v159 = vunpack.c.l.b16 %v140
    %v160 = vunpack.c.l.b16 %v141
    %v161 = vunpack.c.l.b16 %v142
    %v162 = vunpack.c.l.b16 %v143
    %v163 = vunpack.c.l.b16 %v144
    %v164 = vpack.c.b16 %v159, %v158
    %v165 = vpack.c.b16 %v161, %v160
    %v166 = vpack.c.b16 %v163, %v162
    %vm170 = vcmask 392192
    %v171 = vsel %vm170, %v138, 0
    %173 = vmatprep.subr.bf16.mxu0 0
    %174 = vmatpush1.bf16.msra.mxu0 0
    %175 = vmatprep.subr.bf16.mxu0 0
    %176 = vmatpush1.bf16.msra.mxu0 0
    %177 = vmatprep.subr.bf16.mxu0 0
    %178 = vmatpush1.bf16.msra.mxu0 0
    %179 = vmatprep.subr.bf16.mxu0 0
    %180 = vmatpush1.bf16.msra.mxu0 0
    %181 = vmatprep.subr.bf16.mxu0 0
    %182 = vmatpush1.bf16.msra.mxu0 0
    %183 = vmatprep.subr.bf16.mxu0 0
    %184 = vmatpush1.bf16.msra.mxu0 %v166
    %185 = vmatprep.subr.bf16.mxu0 0
    %186 = vmatpush1.bf16.msra.mxu0 %v165
    %187 = vmatprep.subr.bf16.mxu0 0
    %188 = vmatpush1.bf16.msra.mxu0 %v164
    %189 = vmatprep.subr.bf16.mxu0 0
    %190 = vmatpush2.bf16.msra.mxu0 0
    %191 = vmatprep.subr.bf16.mxu0 0
    %192 = vmatpush2.bf16.msra.mxu0 0
    %193 = vmatprep.subr.bf16.mxu0 0
    %194 = vmatpush2.bf16.msra.mxu0 0
    %195 = vmatprep.subr.bf16.mxu0 0
    %196 = vmatpush2.bf16.msra.mxu0 0
    %197 = vmatprep.subr.bf16.mxu0 0
    %198 = vmatpush2.bf16.msra.mxu0 0
    %199 = vmatprep.subr.bf16.mxu0 0
    %200 = vmatpush2.bf16.msra.mxu0 0
    %201 = vmatprep.subr.bf16.mxu0 0
    %202 = vmatpush2.bf16.msra.mxu0 0
    %203 = vmatprep.subr.bf16.mxu0 0
    %204 = vmatpush2.bf16.msra.mxu0 0
    %205 = vmatprep.mubr.bf16.mxu0 0
    %206 = vmatmul.mubr.bf16.gmra.mxu0 %v171
    %v207 = vpop.f32.mrf.mxu0
    %v208 = vadd.f32 %v150, %v207
    %v209 = vpop.f32.mrf.mxu0
    %v210 = vpop.f32.mrf.mxu0
    %v211 = vadd.f32 %v150, %v210
    %v212 = vpop.f32.mrf.mxu0
    %213 = vdwg.mxu0
    %v214 = vmax.f32 %v208, 0.0
    %v215 = vmax.f32 %v211, 0.0
    %v216 = vpack.c.bf16 %v215, %v214
    %s217 = scalar_lea.vmem [#allocation7], 64
    %v218 = vld [vmem:[%s217] sm:$0xf]
    %v219 = vld [vmem:[%s217 + $0x4] sm:$0xf]
    %v220 = vld [vmem:[%s217 + $0x8] sm:$0xf]
    %v221 = vld [vmem:[%s217 + $0xc] sm:$0xf]
    %v222 = vld [vmem:[%s217 + $0x10] sm:$0xf]
    %v223 = vld [vmem:[%s217 + $0x14] sm:$0xf]
    %v224 = vld [vmem:[%s217 + $0x18] sm:$0xf]
    %v225 = vld [vmem:[%s217 + $0x1c] sm:$0xf]
    %v226 = vld [vmem:[%s217 + $0x20] sm:$0xf]
    %v227 = vld [vmem:[%s217 + $0x24] sm:$0xf]
    %v228 = vld [vmem:[%s217 + $0x28] sm:$0xf]
    %v229 = vld [vmem:[%s217 + $0x2c] sm:$0xf]
    %v230 = vld [vmem:[%s217 + $0x30] sm:$0xf]
    %v231 = vld [vmem:[%s217 + $0x34] sm:$0xf]
    %v232 = vld [vmem:[%s217 + $0x38] sm:$0xf]
    %v233 = vld [vmem:[%s217 + $0x3c] sm:$0xf]
    %v234 = vrot.slane %v214, 7
    %v235 = vrot.slane %v215, 7
    %v236 = vsel %vm100, %v234, %v235
    %v237 = vsel %vm100, %v235, %v234
    %v238 = vsel %vm105, 0.0, %v237
    %v239 = vsel %vm106, 0.0, %v236
    %v240 = vpack.c.bf16 %v239, %v238
    %v241 = vld [vmem:[#allocation7] sm:$0xf]
    %v242 = vld [vmem:[#allocation7 + $0x4] sm:$0xf]
    %v243 = vld [vmem:[#allocation7 + $0x8] sm:$0xf]
    %v244 = vld [vmem:[#allocation7 + $0xc] sm:$0xf]
    %v245 = vld [vmem:[#allocation7 + $0x10] sm:$0xf]
    %v246 = vld [vmem:[#allocation7 + $0x14] sm:$0xf]
    %v247 = vld [vmem:[#allocation7 + $0x18] sm:$0xf]
    %v248 = vld [vmem:[#allocation7 + $0x1c] sm:$0xf]
    %v249 = vld [vmem:[#allocation7 + $0x20] sm:$0xf]
    %v250 = vld [vmem:[#allocation7 + $0x24] sm:$0xf]
    %v251 = vld [vmem:[#allocation7 + $0x28] sm:$0xf]
    %v252 = vld [vmem:[#allocation7 + $0x2c] sm:$0xf]
    %v253 = vld [vmem:[#allocation7 + $0x30] sm:$0xf]
    %v254 = vld [vmem:[#allocation7 + $0x34] sm:$0xf]
    %v255 = vld [vmem:[#allocation7 + $0x38] sm:$0xf]
    %v256 = vld [vmem:[#allocation7 + $0x3c] sm:$0xf]
    %v273 = vunpack.c.l.b16 %v241
    %v274 = vunpack.c.l.b16 %v242
    %v275 = vunpack.c.l.b16 %v243
    %v276 = vunpack.c.l.b16 %v244
    %v277 = vunpack.c.l.b16 %v245
    %v278 = vunpack.c.l.b16 %v246
    %v279 = vunpack.c.l.b16 %v247
    %v280 = vunpack.c.l.b16 %v248
    %v281 = vunpack.c.l.b16 %v249
    %v282 = vunpack.c.l.b16 %v250
    %v283 = vunpack.c.l.b16 %v251
    %v284 = vunpack.c.l.b16 %v252
    %v285 = vunpack.c.l.b16 %v253
    %v286 = vunpack.c.l.b16 %v254
    %v287 = vunpack.c.l.b16 %v255
    %v288 = vunpack.c.l.b16 %v256
    %v289 = vpack.c.b16 %v274, %v273
    %v290 = vpack.c.b16 %v276, %v275
    %v291 = vpack.c.b16 %v278, %v277
    %v292 = vpack.c.b16 %v280, %v279
    %v293 = vpack.c.b16 %v282, %v281
    %v294 = vpack.c.b16 %v284, %v283
    %v295 = vpack.c.b16 %v286, %v285
    %v296 = vpack.c.b16 %v288, %v287
    %305 = vmatprep.subr.bf16.mxu0 0
    %306 = vmatpush1.bf16.msra.mxu0 %v296
    %307 = vmatprep.subr.bf16.mxu0 0
    %308 = vmatpush1.bf16.msra.mxu0 %v295
    %309 = vmatprep.subr.bf16.mxu0 0
    %310 = vmatpush1.bf16.msra.mxu0 %v294
    %311 = vmatprep.subr.bf16.mxu0 0
    %312 = vmatpush1.bf16.msra.mxu0 %v293
    %313 = vmatprep.subr.bf16.mxu0 0
    %314 = vmatpush1.bf16.msra.mxu0 %v292
    %315 = vmatprep.subr.bf16.mxu0 0
    %316 = vmatpush1.bf16.msra.mxu0 %v291
    %317 = vmatprep.subr.bf16.mxu0 0
    %318 = vmatpush1.bf16.msra.mxu0 %v290
    %319 = vmatprep.subr.bf16.mxu0 0
    %320 = vmatpush1.bf16.msra.mxu0 %v289
    %321 = vmatprep.subr.bf16.mxu0 0
    %322 = vmatpush2.bf16.msra.mxu0 0
    %323 = vmatprep.subr.bf16.mxu0 0
    %324 = vmatpush2.bf16.msra.mxu0 0
    %325 = vmatprep.subr.bf16.mxu0 0
    %326 = vmatpush2.bf16.msra.mxu0 0
    %327 = vmatprep.subr.bf16.mxu0 0
    %328 = vmatpush2.bf16.msra.mxu0 0
    %329 = vmatprep.subr.bf16.mxu0 0
    %330 = vmatpush2.bf16.msra.mxu0 0
    %331 = vmatprep.subr.bf16.mxu0 0
    %332 = vmatpush2.bf16.msra.mxu0 0
    %333 = vmatprep.subr.bf16.mxu0 0
    %334 = vmatpush2.bf16.msra.mxu0 0
    %335 = vmatprep.subr.bf16.mxu0 0
    %336 = vmatpush2.bf16.msra.mxu0 0
    %337 = vmatprep.mubr.bf16.mxu0 0
    %338 = vmatmul.mubr.bf16.gmra.mxu0 %v240
    %v339 = vpop.f32.mrf.mxu0
    %v340 = vadd.f32 0.0, %v339
    %v341 = vpop.f32.mrf.mxu0
    %v342 = vpop.f32.mrf.mxu0
    %v343 = vadd.f32 0.0, %v342
    %v344 = vpop.f32.mrf.mxu0
    %345 = vdwg.mxu0
    %v362 = vunpack.c.l.b16 %v218
    %v363 = vunpack.c.l.b16 %v219
    %v364 = vunpack.c.l.b16 %v220
    %v365 = vunpack.c.l.b16 %v221
    %v366 = vunpack.c.l.b16 %v222
    %v367 = vunpack.c.l.b16 %v223
    %v368 = vunpack.c.l.b16 %v224
    %v369 = vunpack.c.l.b16 %v225
    %v370 = vunpack.c.l.b16 %v226
    %v371 = vunpack.c.l.b16 %v227
    %v372 = vunpack.c.l.b16 %v228
    %v373 = vunpack.c.l.b16 %v229
    %v374 = vunpack.c.l.b16 %v230
    %v375 = vunpack.c.l.b16 %v231
    %v376 = vunpack.c.l.b16 %v232
    %v377 = vunpack.c.l.b16 %v233
    %v378 = vpack.c.b16 %v363, %v362
    %v379 = vpack.c.b16 %v365, %v364
    %v380 = vpack.c.b16 %v367, %v366
    %v381 = vpack.c.b16 %v369, %v368
    %v382 = vpack.c.b16 %v371, %v370
    %v383 = vpack.c.b16 %v373, %v372
    %v384 = vpack.c.b16 %v375, %v374
    %v385 = vpack.c.b16 %v377, %v376
    %394 = vmatprep.subr.bf16.mxu0 0
    %395 = vmatpush1.bf16.msra.mxu0 %v385
    %396 = vmatprep.subr.bf16.mxu0 0
    %397 = vmatpush1.bf16.msra.mxu0 %v384
    %398 = vmatprep.subr.bf16.mxu0 0
    %399 = vmatpush1.bf16.msra.mxu0 %v383
    %400 = vmatprep.subr.bf16.mxu0 0
    %401 = vmatpush1.bf16.msra.mxu0 %v382
    %402 = vmatprep.subr.bf16.mxu0 0
    %403 = vmatpush1.bf16.msra.mxu0 %v381
    %404 = vmatprep.subr.bf16.mxu0 0
    %405 = vmatpush1.bf16.msra.mxu0 %v380
    %406 = vmatprep.subr.bf16.mxu0 0
    %407 = vmatpush1.bf16.msra.mxu0 %v379
    %408 = vmatprep.subr.bf16.mxu0 0
    %409 = vmatpush1.bf16.msra.mxu0 %v378
    %410 = vmatprep.subr.bf16.mxu0 0
    %411 = vmatpush2.bf16.msra.mxu0 0
    %412 = vmatprep.subr.bf16.mxu0 0
    %413 = vmatpush2.bf16.msra.mxu0 0
    %414 = vmatprep.subr.bf16.mxu0 0
    %415 = vmatpush2.bf16.msra.mxu0 0
    %416 = vmatprep.subr.bf16.mxu0 0
    %417 = vmatpush2.bf16.msra.mxu0 0
    %418 = vmatprep.subr.bf16.mxu0 0
    %419 = vmatpush2.bf16.msra.mxu0 0
    %420 = vmatprep.subr.bf16.mxu0 0
    %421 = vmatpush2.bf16.msra.mxu0 0
    %422 = vmatprep.subr.bf16.mxu0 0
    %423 = vmatpush2.bf16.msra.mxu0 0
    %424 = vmatprep.subr.bf16.mxu0 0
    %425 = vmatpush2.bf16.msra.mxu0 0
    %426 = vmatprep.mubr.bf16.mxu0 0
    %427 = vmatmul.mubr.bf16.gmra.mxu0 %v216
    %v428 = vpop.f32.mrf.mxu0
    %v429 = vadd.f32 %v340, %v428
    %v430 = vpop.f32.mrf.mxu0
    %v431 = vpop.f32.mrf.mxu0
    %v432 = vadd.f32 %v343, %v431
    %v433 = vpop.f32.mrf.mxu0
    %434 = vdwg.mxu0
    %v435 = vrot.slane %v214, 1
    %v436 = vrot.slane %v215, 1
    %v437 = vsel %vm112, %v435, %v436
    %v438 = vsel %vm112, %v436, %v435
    %v439 = vsel %vm117, 0.0, %v437
    %v440 = vsel %vm118, 0.0, %v438
    %v441 = vpack.c.bf16 %v440, %v439
    %s442 = scalar_lea.vmem [#allocation7], 128
    %v443 = vld [vmem:[%s442] sm:$0xf]
    %v444 = vld [vmem:[%s442 + $0x4] sm:$0xf]
    %v445 = vld [vmem:[%s442 + $0x8] sm:$0xf]
    %v446 = vld [vmem:[%s442 + $0xc] sm:$0xf]
    %v447 = vld [vmem:[%s442 + $0x10] sm:$0xf]
    %v448 = vld [vmem:[%s442 + $0x14] sm:$0xf]
    %v449 = vld [vmem:[%s442 + $0x18] sm:$0xf]
    %v450 = vld [vmem:[%s442 + $0x1c] sm:$0xf]
    %v451 = vld [vmem:[%s442 + $0x20] sm:$0xf]
    %v452 = vld [vmem:[%s442 + $0x24] sm:$0xf]
    %v453 = vld [vmem:[%s442 + $0x28] sm:$0xf]
    %v454 = vld [vmem:[%s442 + $0x2c] sm:$0xf]
    %v455 = vld [vmem:[%s442 + $0x30] sm:$0xf]
    %v456 = vld [vmem:[%s442 + $0x34] sm:$0xf]
    %v457 = vld [vmem:[%s442 + $0x38] sm:$0xf]
    %v458 = vld [vmem:[%s442 + $0x3c] sm:$0xf]
    %v475 = vunpack.c.l.b16 %v443
    %v476 = vunpack.c.l.b16 %v444
    %v477 = vunpack.c.l.b16 %v445
    %v478 = vunpack.c.l.b16 %v446
    %v479 = vunpack.c.l.b16 %v447
    %v480 = vunpack.c.l.b16 %v448
    %v481 = vunpack.c.l.b16 %v449
    %v482 = vunpack.c.l.b16 %v450
    %v483 = vunpack.c.l.b16 %v451
    %v484 = vunpack.c.l.b16 %v452
    %v485 = vunpack.c.l.b16 %v453
    %v486 = vunpack.c.l.b16 %v454
    %v487 = vunpack.c.l.b16 %v455
    %v488 = vunpack.c.l.b16 %v456
    %v489 = vunpack.c.l.b16 %v457
    %v490 = vunpack.c.l.b16 %v458
    %v491 = vpack.c.b16 %v476, %v475
    %v492 = vpack.c.b16 %v478, %v477
    %v493 = vpack.c.b16 %v480, %v479
    %v494 = vpack.c.b16 %v482, %v481
    %v495 = vpack.c.b16 %v484, %v483
    %v496 = vpack.c.b16 %v486, %v485
    %v497 = vpack.c.b16 %v488, %v487
    %v498 = vpack.c.b16 %v490, %v489
    %507 = vmatprep.subr.bf16.mxu0 0
    %508 = vmatpush1.bf16.msra.mxu0 %v498
    %509 = vmatprep.subr.bf16.mxu0 0
    %510 = vmatpush1.bf16.msra.mxu0 %v497
    %511 = vmatprep.subr.bf16.mxu0 0
    %512 = vmatpush1.bf16.msra.mxu0 %v496
    %513 = vmatprep.subr.bf16.mxu0 0
    %514 = vmatpush1.bf16.msra.mxu0 %v495
    %515 = vmatprep.subr.bf16.mxu0 0
    %516 = vmatpush1.bf16.msra.mxu0 %v494
    %517 = vmatprep.subr.bf16.mxu0 0
    %518 = vmatpush1.bf16.msra.mxu0 %v493
    %519 = vmatprep.subr.bf16.mxu0 0
    %520 = vmatpush1.bf16.msra.mxu0 %v492
    %521 = vmatprep.subr.bf16.mxu0 0
    %522 = vmatpush1.bf16.msra.mxu0 %v491
    %523 = vmatprep.subr.bf16.mxu0 0
    %524 = vmatpush2.bf16.msra.mxu0 0
    %525 = vmatprep.subr.bf16.mxu0 0
    %526 = vmatpush2.bf16.msra.mxu0 0
    %527 = vmatprep.subr.bf16.mxu0 0
    %528 = vmatpush2.bf16.msra.mxu0 0
    %529 = vmatprep.subr.bf16.mxu0 0
    %530 = vmatpush2.bf16.msra.mxu0 0
    %531 = vmatprep.subr.bf16.mxu0 0
    %532 = vmatpush2.bf16.msra.mxu0 0
    %533 = vmatprep.subr.bf16.mxu0 0
    %534 = vmatpush2.bf16.msra.mxu0 0
    %535 = vmatprep.subr.bf16.mxu0 0
    %536 = vmatpush2.bf16.msra.mxu0 0
    %537 = vmatprep.subr.bf16.mxu0 0
    %538 = vmatpush2.bf16.msra.mxu0 0
    %539 = vmatprep.mubr.bf16.mxu0 0
    %540 = vmatmul.mubr.bf16.gmra.mxu0 %v441
    %v541 = vpop.f32.mrf.mxu0
    %v542 = vadd.f32 0.0, %v541
    %v543 = vpop.f32.mrf.mxu0
    %v544 = vpop.f32.mrf.mxu0
    %v545 = vadd.f32 0.0, %v544
    %v546 = vpop.f32.mrf.mxu0
    %547 = vdwg.mxu0
    %v548 = vadd.f32 %v429, %v542
    %v549 = vadd.f32 %v432, %v545
    %v550 = vld [vmem:[%s4] sm:$0x1]
    %v552 = vlaneseq
    %v553 = vshrl.u32 %v552, 7
    %v554 = vsub.s32 0, %v553
    %v555 = vrot.slane %v550, %v554
    %v557 = vadd.f32 %v548, %v555
    %v558 = vadd.f32 %v549, %v555
    %v559 = vmax.f32 %v557, 0.0
    %v560 = vmax.f32 %v558, 0.0
    %v561 = vrot.slane %v559, 4
    %v562 = vmax.f32 %v559, %v561
    %v563 = vrot.slane %v562, 2
    %v564 = vmax.f32 %v562, %v563
    %v565 = vrot.slane %v564, 1
    %v566 = vmax.f32 %v564, %v565
    %v567 = vrot.slane %v560, 4
    %v568 = vmax.f32 %v560, %v567
    %v569 = vrot.slane %v568, 2
    %v570 = vmax.f32 %v568, %v569
    %v571 = vrot.slane %v570, 1
    %v572 = vmax.f32 %v570, %v571
    %vm575 = vcmask 1041409
    %v576 = vsel %vm575, %v572, %v566
    %578 = vst [vmem:[#allocation8] sm:$0x3] %v576
    // Predicated region
    $region34: #{tpu_custom_call.1} parent=1 // pred_check
      _
    $region35: #{tpu_custom_call.1} parent=1 // pred_check_branch
      %580 = sbr.rel (0) target = $region37
    $region36: #{tpu_custom_call.1} parent=1 // pred_region
      %s582 = ssub.s32 32, 32
      %583 = vsyncadd [#allocation4], %s582
      %s585 = sshll.u32 [#allocation8], 4
      %s586 = int_to_ptr.vmem [resolvable:$true] %s585
      %588 = dma.vmem_to_hbm [thread:$0]  %s586, 32, %s5, [#allocation4]
    $region37: #{tpu_custom_call.1} parent=1 // pred_fallthru
      _
    // Predicated region
    $region38: #{tpu_custom_call.1} parent=1 // pred_check
      _
    $region39: #{tpu_custom_call.1} parent=1 // pred_check_branch
      %590 = sbr.rel (0) target = $region41
    $region40: #{tpu_custom_call.1} parent=1 // pred_region
      %591 = dma.done [#allocation4], 32
    $region41: #{tpu_custom_call.1} parent=1 // pred_fallthru
      _
    %592 = vsyncpa [#allocation3], 1
    %593 = vsyncpa [#allocation6], 1
    %594 = vsyncpa [#allocation4], 1

</llo_original>
